<compile_context>
chip_gen: v7x
topology: tpu7x:2x2x1
jax: 0.10.0
libtpu: 0.0.40
codegen_flags: <defaults>
</compile_context>

<pallas_src>
import jax
import jax.numpy as jnp
from jax.experimental import pallas as pl
from jax.experimental.pallas import tpu as pltpu


def _round_up(n, m):
    return ((n + m - 1) // m) * m


def _cdiv(a, b):
    return -(-a // b)


def _mlp_tile(x, w1, b1, w2, b2, wc, bc):
    """Per-tile math: three MXU matmuls, bf16 operands, f32 accumulation/epilogue."""
    h1 = jnp.dot(x, w1, preferred_element_type=jnp.float32) + b1
    a1 = jnp.maximum(h1, 0.0)
    h2 = jnp.dot(a1.astype(w2.dtype), w2, preferred_element_type=jnp.float32) + b2
    a2 = jnp.maximum(h2, 0.0)
    # Combined layer 3: wc = [I_64 | w3 | 0]  ->  comb[:, :64]  = a2 (exact bf16 copy),
    #                                            comb[:, 64:74] = a2 @ w3 + b3,
    #                                            comb[:, 74:]   = 0.
    # One lane-dense 128-wide store instead of two zero-padded output streams.
    comb = jnp.dot(a2.astype(wc.dtype), wc, preferred_element_type=jnp.float32) + bc
    return a1, comb


def mlp_kernel_with_acts(x_ref, w1_ref, b1_ref, w2_ref, b2_ref, wc_ref, bc_ref,
                         a1_ref, comb_ref):
    a1, comb = _mlp_tile(x_ref[...], w1_ref[...], b1_ref[...], w2_ref[...],
                         b2_ref[...], wc_ref[...], bc_ref[...])
    a1_ref[...] = a1.astype(a1_ref.dtype)          # bf16 diagnostic output
    comb_ref[...] = comb.astype(comb_ref.dtype)    # f32: relu2 + logits packed


def mlp_kernel_logits_only(x_ref, w1_ref, b1_ref, w2_ref, b2_ref, wc_ref, bc_ref,
                           comb_ref):
    _, comb = _mlp_tile(x_ref[...], w1_ref[...], b1_ref[...], w2_ref[...],
                        b2_ref[...], wc_ref[...], bc_ref[...])
    comb_ref[...] = comb.astype(comb_ref.dtype)


def mlp_forward(x_nchw, params, *, tile_b=1024, return_activations=True):
    """Fused MLP forward.

    Returns (logits, activations) where activations mirrors the PyTorch module's
    self.activations list: [relu1_out, relu2_out, logits].  With
    return_activations=False, returns (logits, None) and skips the relu1 stream.
    """
    B = x_nchw.shape[0]
    # nn.Flatten + single bf16 cast of the dominant x stream (f32 acc stays in-kernel).
    x = x_nchw.reshape(B, -1).astype(jnp.bfloat16)
    K = x.shape[1]                                  # 784

    w1, b1, w2, b2, w3, b3 = params
    N1 = w1.shape[1]                                # 128
    N2 = w2.shape[1]                                # 64
    N3 = w3.shape[1]                                # 10
    NP = 128                                        # lane-dense packed output width

    w1b = w1.astype(jnp.bfloat16)
    w2b = w2.astype(jnp.bfloat16)
    b1p = b1.reshape(1, N1).astype(jnp.float32)
    b2p = b2.reshape(1, N2).astype(jnp.float32)
    # Combined layer-3 weight: identity block copies a2 into cols [0:64) (1.0 is exact
    # in bf16), w3 writes logits into cols [64:74), remaining cols are zero.
    wc = jnp.zeros((N2, NP), jnp.float32)
    wc = wc.at[:, :N2].set(jnp.eye(N2, dtype=jnp.float32))
    wc = wc.at[:, N2:N2 + N3].set(w3.astype(jnp.float32))
    wc = wc.astype(jnp.bfloat16)
    bc = jnp.zeros((1, NP), jnp.float32).at[0, N2:N2 + N3].set(b3.astype(jnp.float32))

    # Ragged-aware batch tiling: bound padding waste (TB tracks ceil(B / n_tiles)),
    # 16-row granule for bf16 sublane packing, and >= 2 grid steps for batches >= 32
    # so both v7x TensorCores get a tile.
    n_tiles = max(_cdiv(B, tile_b), 1)
    if n_tiles == 1 and B >= 32:
        n_tiles = 2
    TB = _round_up(_cdiv(B, n_tiles), 16)
    n_tiles = _cdiv(B, TB)
    B_pad = n_tiles * TB
    if B_pad != B:
        x = jnp.pad(x, ((0, B_pad - B), (0, 0)))
    grid = (n_tiles,)

    const = lambda shape: pl.BlockSpec(shape, lambda i: (0, 0))  # VMEM-resident params
    in_specs = [
        pl.BlockSpec((TB, K), lambda i: (i, 0)),    # x: streamed, double-buffered
        const((K, N1)), const((1, N1)),             # w1 (bf16), b1 (f32)
        const((N1, N2)), const((1, N2)),            # w2 (bf16), b2 (f32)
        const((N2, NP)), const((1, NP)),            # wc (bf16), bc (f32)
    ]
    compiler_params = pltpu.CompilerParams(
        dimension_semantics=("parallel",),
        # ~6 MiB actually needed at TB=1024; never request all of v7x's 64 MiB.
        vmem_limit_bytes=32 << 20,
    )

    if return_activations:
        a1, comb = pl.pallas_call(
            mlp_kernel_with_acts,
            out_shape=(
                jax.ShapeDtypeStruct((B_pad, N1), jnp.bfloat16),
                jax.ShapeDtypeStruct((B_pad, NP), jnp.float32),
            ),
            grid=grid,
            in_specs=in_specs,
            out_specs=(
                pl.BlockSpec((TB, N1), lambda i: (i, 0)),
                pl.BlockSpec((TB, NP), lambda i: (i, 0)),
            ),
            compiler_params=compiler_params,
        )(x, w1b, b1p, w2b, b2p, wc, bc)
        logits = comb[:B, N2:N2 + N3]
        # TODO(synk): PyTorch stashes activations via .detach().cpu().numpy() (a host
        # side effect); here they are returned as device arrays (relu1 in bf16).
        activations = [a1[:B], comb[:B, :N2], logits]
        return logits, activations

    comb = pl.pallas_call(
        mlp_kernel_logits_only,
        out_shape=jax.ShapeDtypeStruct((B_pad, NP), jnp.float32),
        grid=grid,
        in_specs=in_specs,
        out_specs=pl.BlockSpec((TB, NP), lambda i: (i, 0)),
        compiler_params=compiler_params,
    )(x, w1b, b1p, w2b, b2p, wc, bc)
    return comb[:B, N2:N2 + N3], None


def init_params(key):
    """Deterministic init with PyTorch Linear shapes, stored as (in, out), f32."""
    def linear(key, fan_in, fan_out):
        kw, kb = jax.random.split(key)
        bound = 1.0 / jnp.sqrt(fan_in)
        # PyTorch weight is (out, in); transpose to (in, out) for x @ W.
        w = jax.random.uniform(kw, (fan_out, fan_in), jnp.float32, -bound, bound).T
        b = jax.random.uniform(kb, (fan_out,), jnp.float32, -bound, bound)
        return w, b

    k1, k2, k3 = jax.random.split(key, 3)
    w1, b1 = linear(k1, 28 * 28, 128)
    w2, b2 = linear(k2, 128, 64)
    w3, b3 = linear(k3, 64, 10)
    return (w1, b1, w2, b2, w3, b3)


if __name__ == "__main__":
    key = jax.random.PRNGKey(0)
    kx, kp = jax.random.split(key)
    # Small MNIST-like batch: (B, C, H, W) = (8, 1, 28, 28)
    x = jax.random.normal(kx, (8, 1, 28, 28), jnp.float32)
    params = init_params(kp)

    logits, acts = mlp_forward(x, params)
    jax.block_until_ready(logits)

    # Reference in plain JAX using the same bf16-operand / f32-accumulation recipe.
    w1, b1, w2, b2, w3, b3 = params
    xf = x.reshape(8, -1)
    r1 = jnp.maximum(
        jnp.dot(xf.astype(jnp.bfloat16), w1.astype(jnp.bfloat16),
                preferred_element_type=jnp.float32) + b1, 0.0)
    r2 = jnp.maximum(
        jnp.dot(r1.astype(jnp.bfloat16), w2.astype(jnp.bfloat16),
                preferred_element_type=jnp.float32) + b2, 0.0)
    ref = jnp.dot(r2.astype(jnp.bfloat16), w3.astype(jnp.bfloat16),
                  preferred_element_type=jnp.float32) + b3
    # Full-f32 reference (PyTorch numerics) for a loose sanity check.
    r1f = jnp.maximum(xf @ w1 + b1, 0.0)
    r2f = jnp.maximum(r1f @ w2 + b2, 0.0)
    ref_f32 = r2f @ w3 + b3

    assert logits.shape == (8, 10)
    assert acts[0].shape == (8, 128) and acts[1].shape == (8, 64)
    assert jnp.allclose(logits, ref, atol=2e-2, rtol=2e-2)
    assert jnp.allclose(acts[0].astype(jnp.float32), r1, atol=2e-2, rtol=2e-2)
    assert jnp.allclose(acts[1], r2, atol=2e-2, rtol=2e-2)
    assert jnp.allclose(logits, ref_f32, atol=1e-1, rtol=1e-1)

    print("KERNEL_OK")
</pallas_src>

<mosaic_0001>
module attributes {stable_mosaic.version = 11 : i64} {
  func.func @mlp_kernel_with_acts(%arg0: i32, %arg1: memref<16x784xbf16, #tpu.memory_space<vmem>>, %arg2: memref<784x128xbf16, #tpu.memory_space<vmem>>, %arg3: memref<1x128xf32, #tpu.memory_space<vmem>>, %arg4: memref<128x64xbf16, #tpu.memory_space<vmem>>, %arg5: memref<1x64xf32, #tpu.memory_space<vmem>>, %arg6: memref<64x128xbf16, #tpu.memory_space<vmem>>, %arg7: memref<1x128xf32, #tpu.memory_space<vmem>>, %arg8: memref<16x128xbf16, #tpu.memory_space<vmem>>, %arg9: memref<16x128xf32, #tpu.memory_space<vmem>>) attributes {dimension_semantics = [#tpu.dimension_semantics<parallel>], iteration_bounds = array<i64: 1>, scalar_prefetch = 0 : i64, scratch_operands = 0 : i64, tpu.core_type = #tpu.core_type<tc>, window_params = [{transform_indices = @transform_0, window_bounds = array<i64: 16, 784>}, {pipeline_mode = #tpu.pipeline_mode<synchronous>, transform_indices = @transform_1, window_bounds = array<i64: 784, 128>}, {pipeline_mode = #tpu.pipeline_mode<synchronous>, transform_indices = @transform_2, window_bounds = array<i64: 1, 128>}, {pipeline_mode = #tpu.pipeline_mode<synchronous>, transform_indices = @transform_3, window_bounds = array<i64: 128, 64>}, {pipeline_mode = #tpu.pipeline_mode<synchronous>, transform_indices = @transform_4, window_bounds = array<i64: 1, 64>}, {pipeline_mode = #tpu.pipeline_mode<synchronous>, transform_indices = @transform_5, window_bounds = array<i64: 64, 128>}, {pipeline_mode = #tpu.pipeline_mode<synchronous>, transform_indices = @transform_6, window_bounds = array<i64: 1, 128>}, {transform_indices = @transform_7, window_bounds = array<i64: 16, 128>}, {transform_indices = @transform_8, window_bounds = array<i64: 16, 128>}]} {
    %c0 = arith.constant 0 : index
    %c0_0 = arith.constant 0 : index
    %0 = vector.load %arg1[%c0, %c0_0] : memref<16x784xbf16, #tpu.memory_space<vmem>>, vector<16x784xbf16>
    %c0_1 = arith.constant 0 : index
    %c0_2 = arith.constant 0 : index
    %1 = vector.load %arg2[%c0_1, %c0_2] : memref<784x128xbf16, #tpu.memory_space<vmem>>, vector<784x128xbf16>
    %c0_3 = arith.constant 0 : index
    %c0_4 = arith.constant 0 : index
    %2 = vector.load %arg3[%c0_3, %c0_4] : memref<1x128xf32, #tpu.memory_space<vmem>>, vector<1x128xf32>
    %c0_5 = arith.constant 0 : index
    %c0_6 = arith.constant 0 : index
    %3 = vector.load %arg4[%c0_5, %c0_6] : memref<128x64xbf16, #tpu.memory_space<vmem>>, vector<128x64xbf16>
    %c0_7 = arith.constant 0 : index
    %c0_8 = arith.constant 0 : index
    %4 = vector.load %arg5[%c0_7, %c0_8] : memref<1x64xf32, #tpu.memory_space<vmem>>, vector<1x64xf32>
    %c0_9 = arith.constant 0 : index
    %c0_10 = arith.constant 0 : index
    %5 = vector.load %arg6[%c0_9, %c0_10] : memref<64x128xbf16, #tpu.memory_space<vmem>>, vector<64x128xbf16>
    %c0_11 = arith.constant 0 : index
    %c0_12 = arith.constant 0 : index
    %6 = vector.load %arg7[%c0_11, %c0_12] : memref<1x128xf32, #tpu.memory_space<vmem>>, vector<1x128xf32>
    %cst = arith.constant dense<0.000000e+00> : vector<16x128xf32>
    %7 = tpu.matmul %0, %1, %cst {dimension_numbers = #tpu.dot_dimension_numbers<[1], [0], [0], [1], [0, 0, 1, 1], [], []>} : vector<16x784xbf16>, vector<784x128xbf16>, vector<16x128xf32> -> vector<16x128xf32>
    %8 = vector.broadcast %2 : vector<1x128xf32> to vector<16x128xf32>
    %9 = arith.addf %7, %8 : vector<16x128xf32>
    %cst_13 = arith.constant 0.000000e+00 : f32
    %10 = vector.broadcast %cst_13 : f32 to vector<16x128xf32>
    %11 = arith.maximumf %9, %10 : vector<16x128xf32>
    %12 = arith.truncf %11 : vector<16x128xf32> to vector<16x128xbf16>
    %cst_14 = arith.constant dense<0.000000e+00> : vector<16x64xf32>
    %13 = tpu.matmul %12, %3, %cst_14 {dimension_numbers = #tpu.dot_dimension_numbers<[1], [0], [0], [1], [0, 0, 1, 1], [], []>} : vector<16x128xbf16>, vector<128x64xbf16>, vector<16x64xf32> -> vector<16x64xf32>
    %14 = vector.broadcast %4 : vector<1x64xf32> to vector<16x64xf32>
    %15 = arith.addf %13, %14 : vector<16x64xf32>
    %cst_15 = arith.constant 0.000000e+00 : f32
    %16 = vector.broadcast %cst_15 : f32 to vector<16x64xf32>
    %17 = arith.maximumf %15, %16 : vector<16x64xf32>
    %18 = arith.truncf %17 : vector<16x64xf32> to vector<16x64xbf16>
    %cst_16 = arith.constant dense<0.000000e+00> : vector<16x128xf32>
    %19 = tpu.matmul %18, %5, %cst_16 {dimension_numbers = #tpu.dot_dimension_numbers<[1], [0], [0], [1], [0, 0, 1, 1], [], []>} : vector<16x64xbf16>, vector<64x128xbf16>, vector<16x128xf32> -> vector<16x128xf32>
    %20 = vector.broadcast %6 : vector<1x128xf32> to vector<16x128xf32>
    %21 = arith.addf %19, %20 : vector<16x128xf32>
    %22 = arith.truncf %11 : vector<16x128xf32> to vector<16x128xbf16>
    %c0_17 = arith.constant 0 : index
    %c0_18 = arith.constant 0 : index
    %23 = vector.load %arg8[%c0_17, %c0_18] : memref<16x128xbf16, #tpu.memory_space<vmem>>, vector<16x128xbf16>
    tpu.vector_store %arg8[%c0_17, %c0_18], %22 {strides = array<i32>} : memref<16x128xbf16, #tpu.memory_space<vmem>>, vector<16x128xbf16>,
    %c0_19 = arith.constant 0 : index
    %c0_20 = arith.constant 0 : index
    %24 = vector.load %arg9[%c0_19, %c0_20] : memref<16x128xf32, #tpu.memory_space<vmem>>, vector<16x128xf32>
    tpu.vector_store %arg9[%c0_19, %c0_20], %21 {strides = array<i32>} : memref<16x128xf32, #tpu.memory_space<vmem>>, vector<16x128xf32>,
    return
  }
  func.func @transform_0(%arg0: i32) -> (i32, i32) {
    %c0_i32 = arith.constant 0 : i32
    %c0_i32_0 = arith.constant 0 : i32
    return %arg0, %c0_i32 : i32, i32
  }
  func.func @transform_1(%arg0: i32) -> (i32, i32) {
    %c0_i32 = arith.constant 0 : i32
    %c0_i32_0 = arith.constant 0 : i32
    %c0_i32_1 = arith.constant 0 : i32
    return %c0_i32, %c0_i32_0 : i32, i32
  }
  func.func @transform_2(%arg0: i32) -> (i32, i32) {
    %c0_i32 = arith.constant 0 : i32
    %c0_i32_0 = arith.constant 0 : i32
    %c0_i32_1 = arith.constant 0 : i32
    return %c0_i32, %c0_i32_0 : i32, i32
  }
  func.func @transform_3(%arg0: i32) -> (i32, i32) {
    %c0_i32 = arith.constant 0 : i32
    %c0_i32_0 = arith.constant 0 : i32
    %c0_i32_1 = arith.constant 0 : i32
    return %c0_i32, %c0_i32_0 : i32, i32
  }
  func.func @transform_4(%arg0: i32) -> (i32, i32) {
    %c0_i32 = arith.constant 0 : i32
    %c0_i32_0 = arith.constant 0 : i32
    %c0_i32_1 = arith.constant 0 : i32
    return %c0_i32, %c0_i32_0 : i32, i32
  }
  func.func @transform_5(%arg0: i32) -> (i32, i32) {
    %c0_i32 = arith.constant 0 : i32
    %c0_i32_0 = arith.constant 0 : i32
    %c0_i32_1 = arith.constant 0 : i32
    return %c0_i32, %c0_i32_0 : i32, i32
  }
  func.func @transform_6(%arg0: i32) -> (i32, i32) {
    %c0_i32 = arith.constant 0 : i32
    %c0_i32_0 = arith.constant 0 : i32
    %c0_i32_1 = arith.constant 0 : i32
    return %c0_i32, %c0_i32_0 : i32, i32
  }
  func.func @transform_7(%arg0: i32) -> (i32, i32) {
    %c0_i32 = arith.constant 0 : i32
    %c0_i32_0 = arith.constant 0 : i32
    return %arg0, %c0_i32 : i32, i32
  }
  func.func @transform_8(%arg0: i32) -> (i32, i32) {
    %c0_i32 = arith.constant 0 : i32
    %c0_i32_0 = arith.constant 0 : i32
    return %arg0, %c0_i32 : i32, i32
  }
}

</mosaic_0001>

<llo_original>
// kernel: tpu_custom_call.1
$region0: #{tpu_custom_call.1}
  #allocation0 [shape = 'u32[]', space=smem, size = 0x4, offset = 0x4, fixed_abs, tag = 'smem constant byte address 0x4 - core index']
  #allocation1 [shape = 'u32[144,128]{1,0:T(1,128)}', space=vmem, size = 0x12000, scoped, tag = 'internal scratch']
  %s0 = inlined_call_operand.vmem [shape: bf16[16,784], index: 0, kind: input, shape index: {}]
  %s1 = inlined_call_operand.hbm [shape: bf16[784,128], index: 1, kind: input, shape index: {}]
  %s2 = inlined_call_operand.vmem [shape: f32[1,128], index: 2, kind: input, shape index: {}]
  %s3 = inlined_call_operand.vmem [shape: bf16[128,64], index: 3, kind: input, shape index: {}]
  %s4 = inlined_call_operand.vmem [shape: f32[1,64], index: 4, kind: input, shape index: {}]
  %s5 = inlined_call_operand.vmem [shape: bf16[64,128], index: 5, kind: input, shape index: {}]
  %s6 = inlined_call_operand.vmem [shape: f32[1,128], index: 6, kind: input, shape index: {}]
  %s7 = inlined_call_operand.hbm [shape: bf16[16,128], index: 7, kind: output, shape index: {0}]
  %s8 = inlined_call_operand.hbm [shape: f32[16,128], index: 8, kind: output, shape index: {1}]
  %9 = xla_tuple %s7, %s8
  %s10 = sld [smem:[#allocation0]]
  $region50: #{tpu_custom_call.1} parent=0
    _
  %s12 = ssub.s32 1, %s10
  %s13 = scalar_select 0, %s12, %s10
  $region1: #{tpu_custom_call.1} parent=0
    #allocation2 [shape = 'u8[200704]{0}', space=vmem, size = 0x31000, scoped, tag = 'input window, operand 1, single buffered']
    #allocation3 [shape = 's32[1]{0}', space=sflag, size = 0x4, scoped, tag = 'scoped memory for tpu_custom_call.1']
    #allocation4 [shape = 's32[1]{0}', space=sflag, size = 0x4, scoped, tag = 'scoped memory for tpu_custom_call.1']
    #allocation5 [shape = 'u8[4096]{0}', space=vmem, size = 0x1000, scoped, tag = 'output window, operand 0, single buffered']
    #allocation6 [shape = 'u8[8192]{0}', space=vmem, size = 0x2000, scoped, tag = 'output window, operand 1, single buffered']
    #allocation7 [shape = 's32[1]{0}', space=sflag, size = 0x4, scoped, tag = 'scoped memory for tpu_custom_call.1']
    %14 = vsyncpa [#allocation3], 0
    %15 = vsyncpa [#allocation4], 0
    %16 = vsyncpa [#allocation7], 0
    // Predicated region
    $region2: #{tpu_custom_call.1} parent=1 // pred_check
      _
    $region3: #{tpu_custom_call.1} parent=1 // pred_check_branch
      %18 = sbr.rel (0) target = $region5
    $region4: #{tpu_custom_call.1} parent=1 // pred_region
      _
    $region5: #{tpu_custom_call.1} parent=1 // pred_fallthru
      _
    // Predicated region
    $region6: #{tpu_custom_call.1} parent=1 // pred_check
      _
    $region7: #{tpu_custom_call.1} parent=1 // pred_check_branch
      %20 = sbr.rel (0) target = $region9
    $region8: #{tpu_custom_call.1} parent=1 // pred_region
      %s22 = ssub.s32 6272, 6272
      %23 = vsyncadd [#allocation3], %s22
      %s24 = sshll.u32 [#allocation2], 4
      %s25 = int_to_ptr.vmem [resolvable:$true] %s24
      %30 = dma.hbm_to_vmem [thread:$0]  %s1, 6272, %s25, [#allocation3], 64, 64, 4
    $region9: #{tpu_custom_call.1} parent=1 // pred_fallthru
      _
    // Predicated region
    $region10: #{tpu_custom_call.1} parent=1 // pred_check
      _
    $region11: #{tpu_custom_call.1} parent=1 // pred_check_branch
      %32 = sbr.rel (0) target = $region13
    $region12: #{tpu_custom_call.1} parent=1 // pred_region
      _
    $region13: #{tpu_custom_call.1} parent=1 // pred_fallthru
      _
    // Predicated region
    $region14: #{tpu_custom_call.1} parent=1 // pred_check
      _
    $region15: #{tpu_custom_call.1} parent=1 // pred_check_branch
      %34 = sbr.rel (0) target = $region17
    $region16: #{tpu_custom_call.1} parent=1 // pred_region
      _
    $region17: #{tpu_custom_call.1} parent=1 // pred_fallthru
      _
    // Predicated region
    $region18: #{tpu_custom_call.1} parent=1 // pred_check
      _
    $region19: #{tpu_custom_call.1} parent=1 // pred_check_branch
      %36 = sbr.rel (0) target = $region21
    $region20: #{tpu_custom_call.1} parent=1 // pred_region
      _
    $region21: #{tpu_custom_call.1} parent=1 // pred_fallthru
      _
    // Predicated region
    $region22: #{tpu_custom_call.1} parent=1 // pred_check
      _
    $region23: #{tpu_custom_call.1} parent=1 // pred_check_branch
      %38 = sbr.rel (0) target = $region25
    $region24: #{tpu_custom_call.1} parent=1 // pred_region
      _
    $region25: #{tpu_custom_call.1} parent=1 // pred_fallthru
      _
    // Predicated region
    $region26: #{tpu_custom_call.1} parent=1 // pred_check
      _
    $region27: #{tpu_custom_call.1} parent=1 // pred_check_branch
      %40 = sbr.rel (0) target = $region29
    $region28: #{tpu_custom_call.1} parent=1 // pred_region
      _
    $region29: #{tpu_custom_call.1} parent=1 // pred_fallthru
      _
    // Predicated region
    $region30: #{tpu_custom_call.1} parent=1 // pred_check
      _
    $region31: #{tpu_custom_call.1} parent=1 // pred_check_branch
      %42 = sbr.rel (0) target = $region33
    $region32: #{tpu_custom_call.1} parent=1 // pred_region
      %43 = dma.done [#allocation3], 6272
    $region33: #{tpu_custom_call.1} parent=1 // pred_fallthru
      _
    %v45 = vld [vmem:[%s0] sm:$0xff]
    %v46 = vld [vmem:[%s0 + $0x8] sm:$0xff]
    %v47 = vld [vmem:[%s0 + $0x10] sm:$0xff]
    %v48 = vld [vmem:[%s0 + $0x18] sm:$0xf]
    %v49 = vld [vmem:[%s0 + $0x1c] sm:$0xff]
    %v50 = vld [vmem:[%s0 + $0x24] sm:$0xff]
    %v51 = vld [vmem:[%s0 + $0x2c] sm:$0xff]
    %v52 = vld [vmem:[%s0 + $0x34] sm:$0xf]
    %v53 = vld [vmem:[#allocation2] sm:$0xf]
    %v54 = vld [vmem:[#allocation2 + $0x4] sm:$0xf]
    %v55 = vld [vmem:[#allocation2 + $0x8] sm:$0xf]
    %v56 = vld [vmem:[#allocation2 + $0xc] sm:$0xf]
    %v57 = vld [vmem:[#allocation2 + $0x10] sm:$0xf]
    %v58 = vld [vmem:[#allocation2 + $0x14] sm:$0xf]
    %v59 = vld [vmem:[#allocation2 + $0x18] sm:$0xf]
    %v60 = vld [vmem:[#allocation2 + $0x1c] sm:$0xf]
    %v61 = vld [vmem:[#allocation2 + $0x20] sm:$0xf]
    %v62 = vld [vmem:[#allocation2 + $0x24] sm:$0xf]
    %v63 = vld [vmem:[#allocation2 + $0x28] sm:$0xf]
    %v64 = vld [vmem:[#allocation2 + $0x2c] sm:$0xf]
    %v65 = vld [vmem:[#allocation2 + $0x30] sm:$0xf]
    %v66 = vld [vmem:[#allocation2 + $0x34] sm:$0xf]
    %v67 = vld [vmem:[#allocation2 + $0x38] sm:$0xf]
    %v68 = vld [vmem:[#allocation2 + $0x3c] sm:$0xf]
    %v69 = vld [vmem:[#allocation2 + $0x40] sm:$0xf]
    %v70 = vld [vmem:[#allocation2 + $0x44] sm:$0xf]
    %v71 = vld [vmem:[#allocation2 + $0x48] sm:$0xf]
    %v72 = vld [vmem:[#allocation2 + $0x4c] sm:$0xf]
    %v73 = vld [vmem:[#allocation2 + $0x50] sm:$0xf]
    %v74 = vld [vmem:[#allocation2 + $0x54] sm:$0xf]
    %v75 = vld [vmem:[#allocation2 + $0x58] sm:$0xf]
    %v76 = vld [vmem:[#allocation2 + $0x5c] sm:$0xf]
    %v77 = vld [vmem:[#allocation2 + $0x60] sm:$0xf]
    %v78 = vld [vmem:[#allocation2 + $0x64] sm:$0xf]
    %v79 = vld [vmem:[#allocation2 + $0x68] sm:$0xf]
    %v80 = vld [vmem:[#allocation2 + $0x6c] sm:$0xf]
    %v81 = vld [vmem:[#allocation2 + $0x70] sm:$0xf]
    %v82 = vld [vmem:[#allocation2 + $0x74] sm:$0xf]
    %v83 = vld [vmem:[#allocation2 + $0x78] sm:$0xf]
    %v84 = vld [vmem:[#allocation2 + $0x7c] sm:$0xf]
    %v85 = vld [vmem:[#allocation2 + $0x80] sm:$0xf]
    %v86 = vld [vmem:[#allocation2 + $0x84] sm:$0xf]
    %v87 = vld [vmem:[#allocation2 + $0x88] sm:$0xf]
    %v88 = vld [vmem:[#allocation2 + $0x8c] sm:$0xf]
    %v89 = vld [vmem:[#allocation2 + $0x90] sm:$0xf]
    %v90 = vld [vmem:[#allocation2 + $0x94] sm:$0xf]
    %v91 = vld [vmem:[#allocation2 + $0x98] sm:$0xf]
    %v92 = vld [vmem:[#allocation2 + $0x9c] sm:$0xf]
    %v93 = vld [vmem:[#allocation2 + $0xa0] sm:$0xf]
    %v94 = vld [vmem:[#allocation2 + $0xa4] sm:$0xf]
    %v95 = vld [vmem:[#allocation2 + $0xa8] sm:$0xf]
    %v96 = vld [vmem:[#allocation2 + $0xac] sm:$0xf]
    %v97 = vld [vmem:[#allocation2 + $0xb0] sm:$0xf]
    %v98 = vld [vmem:[#allocation2 + $0xb4] sm:$0xf]
    %v99 = vld [vmem:[#allocation2 + $0xb8] sm:$0xf]
    %v100 = vld [vmem:[#allocation2 + $0xbc] sm:$0xf]
    %v101 = vld [vmem:[#allocation2 + $0xc0] sm:$0xf]
    %v102 = vld [vmem:[#allocation2 + $0xc4] sm:$0xf]
    %v103 = vld [vmem:[#allocation2 + $0xc8] sm:$0xf]
    %v104 = vld [vmem:[#allocation2 + $0xcc] sm:$0xf]
    %v105 = vld [vmem:[#allocation2 + $0xd0] sm:$0xf]
    %v106 = vld [vmem:[#allocation2 + $0xd4] sm:$0xf]
    %v107 = vld [vmem:[#allocation2 + $0xd8] sm:$0xf]
    %v108 = vld [vmem:[#allocation2 + $0xdc] sm:$0xf]
    %v109 = vld [vmem:[#allocation2 + $0xe0] sm:$0xf]
    %v110 = vld [vmem:[#allocation2 + $0xe4] sm:$0xf]
    %v111 = vld [vmem:[#allocation2 + $0xe8] sm:$0xf]
    %v112 = vld [vmem:[#allocation2 + $0xec] sm:$0xf]
    %v113 = vld [vmem:[#allocation2 + $0xf0] sm:$0xf]
    %v114 = vld [vmem:[#allocation2 + $0xf4] sm:$0xf]
    %v115 = vld [vmem:[#allocation2 + $0xf8] sm:$0xf]
    %v116 = vld [vmem:[#allocation2 + $0xfc] sm:$0xf]
    %v117 = vld [vmem:[#allocation2 + $0x100] sm:$0xf]
    %v118 = vld [vmem:[#allocation2 + $0x104] sm:$0xf]
    %v119 = vld [vmem:[#allocation2 + $0x108] sm:$0xf]
    %v120 = vld [vmem:[#allocation2 + $0x10c] sm:$0xf]
    %v121 = vld [vmem:[#allocation2 + $0x110] sm:$0xf]
    %v122 = vld [vmem:[#allocation2 + $0x114] sm:$0xf]
    %v123 = vld [vmem:[#allocation2 + $0x118] sm:$0xf]
    %v124 = vld [vmem:[#allocation2 + $0x11c] sm:$0xf]
    %v125 = vld [vmem:[#allocation2 + $0x120] sm:$0xf]
    %v126 = vld [vmem:[#allocation2 + $0x124] sm:$0xf]
    %v127 = vld [vmem:[#allocation2 + $0x128] sm:$0xf]
    %v128 = vld [vmem:[#allocation2 + $0x12c] sm:$0xf]
    %v129 = vld [vmem:[#allocation2 + $0x130] sm:$0xf]
    %v130 = vld [vmem:[#allocation2 + $0x134] sm:$0xf]
    %v131 = vld [vmem:[#allocation2 + $0x138] sm:$0xf]
    %v132 = vld [vmem:[#allocation2 + $0x13c] sm:$0xf]
    %v133 = vld [vmem:[#allocation2 + $0x140] sm:$0xf]
    %v134 = vld [vmem:[#allocation2 + $0x144] sm:$0xf]
    %v135 = vld [vmem:[#allocation2 + $0x148] sm:$0xf]
    %v136 = vld [vmem:[#allocation2 + $0x14c] sm:$0xf]
    %v137 = vld [vmem:[#allocation2 + $0x150] sm:$0xf]
    %v138 = vld [vmem:[#allocation2 + $0x154] sm:$0xf]
    %v139 = vld [vmem:[#allocation2 + $0x158] sm:$0xf]
    %v140 = vld [vmem:[#allocation2 + $0x15c] sm:$0xf]
    %v141 = vld [vmem:[#allocation2 + $0x160] sm:$0xf]
    %v142 = vld [vmem:[#allocation2 + $0x164] sm:$0xf]
    %v143 = vld [vmem:[#allocation2 + $0x168] sm:$0xf]
    %v144 = vld [vmem:[#allocation2 + $0x16c] sm:$0xf]
    %v145 = vld [vmem:[#allocation2 + $0x170] sm:$0xf]
    %v146 = vld [vmem:[#allocation2 + $0x174] sm:$0xf]
    %v147 = vld [vmem:[#allocation2 + $0x178] sm:$0xf]
    %v148 = vld [vmem:[#allocation2 + $0x17c] sm:$0xf]
    %v149 = vld [vmem:[#allocation2 + $0x180] sm:$0xf]
    %v150 = vld [vmem:[#allocation2 + $0x184] sm:$0xf]
    %v151 = vld [vmem:[%s2] sm:$0x1]
    %v152 = vld [vmem:[%s3] sm:$0xf]
    %v153 = vld [vmem:[%s3 + $0x4] sm:$0xf]
    %v154 = vld [vmem:[%s3 + $0x8] sm:$0xf]
    %v155 = vld [vmem:[%s3 + $0xc] sm:$0xf]
    %v156 = vld [vmem:[%s3 + $0x10] sm:$0xf]
    %v157 = vld [vmem:[%s3 + $0x14] sm:$0xf]
    %v158 = vld [vmem:[%s3 + $0x18] sm:$0xf]
    %v159 = vld [vmem:[%s3 + $0x1c] sm:$0xf]
    %v160 = vld [vmem:[%s3 + $0x20] sm:$0xf]
    %v161 = vld [vmem:[%s3 + $0x24] sm:$0xf]
    %v162 = vld [vmem:[%s3 + $0x28] sm:$0xf]
    %v163 = vld [vmem:[%s3 + $0x2c] sm:$0xf]
    %v164 = vld [vmem:[%s3 + $0x30] sm:$0xf]
    %v165 = vld [vmem:[%s3 + $0x34] sm:$0xf]
    %v166 = vld [vmem:[%s3 + $0x38] sm:$0xf]
    %v167 = vld [vmem:[%s3 + $0x3c] sm:$0xf]
    %v168 = vld [vmem:[%s4] sm:$0x1]
    %v169 = vld [vmem:[%s5] sm:$0xf]
    %v170 = vld [vmem:[%s5 + $0x4] sm:$0xf]
    %v171 = vld [vmem:[%s5 + $0x8] sm:$0xf]
    %v172 = vld [vmem:[%s5 + $0xc] sm:$0xf]
    %v173 = vld [vmem:[%s5 + $0x10] sm:$0xf]
    %v174 = vld [vmem:[%s5 + $0x14] sm:$0xf]
    %v175 = vld [vmem:[%s5 + $0x18] sm:$0xf]
    %v176 = vld [vmem:[%s5 + $0x1c] sm:$0xf]
    %v177 = vld [vmem:[%s6] sm:$0x1]
    %v179 = vlaneseq
    %v180 = vshrl.u32 %v179, 7
    %v181 = vsub.s32 0, %v180
    %v182 = vrot.slane %v151, %v181
    %v192 = vunpack.c.l.b16 %v45
    %v193 = vunpack.c.h.b16 %v45
    %v194 = vunpack.c.l.b16 %v46
    %v195 = vunpack.c.h.b16 %v46
    %v196 = vunpack.c.l.b16 %v47
    %v197 = vunpack.c.h.b16 %v47
    %v198 = vunpack.c.l.b16 %v48
    %v199 = vunpack.c.l.b16 %v49
    %v200 = vunpack.c.h.b16 %v49
    %v201 = vunpack.c.l.b16 %v50
    %v202 = vunpack.c.h.b16 %v50
    %v203 = vunpack.c.l.b16 %v51
    %v204 = vunpack.c.h.b16 %v51
    %v205 = vunpack.c.l.b16 %v52
    %v206 = vpack.c.b16 %v199, %v192
    %v207 = vpack.c.b16 %v200, %v193
    %v208 = vpack.c.b16 %v201, %v194
    %v209 = vpack.c.b16 %v202, %v195
    %v210 = vpack.c.b16 %v203, %v196
    %v211 = vpack.c.b16 %v204, %v197
    %v212 = vpack.c.b16 %v205, %v198
    %v317 = vunpack.c.l.b16 %v53
    %v318 = vunpack.c.l.b16 %v54
    %v319 = vunpack.c.l.b16 %v55
    %v320 = vunpack.c.l.b16 %v56
    %v321 = vunpack.c.l.b16 %v57
    %v322 = vunpack.c.l.b16 %v58
    %v323 = vunpack.c.l.b16 %v59
    %v324 = vunpack.c.l.b16 %v60
    %v325 = vunpack.c.l.b16 %v61
    %v326 = vunpack.c.l.b16 %v62
    %v327 = vunpack.c.l.b16 %v63
    %v328 = vunpack.c.l.b16 %v64
    %v329 = vunpack.c.l.b16 %v65
    %v330 = vunpack.c.l.b16 %v66
    %v331 = vunpack.c.l.b16 %v67
    %v332 = vunpack.c.l.b16 %v68
    %v333 = vunpack.c.l.b16 %v69
    %v334 = vunpack.c.l.b16 %v70
    %v335 = vunpack.c.l.b16 %v71
    %v336 = vunpack.c.l.b16 %v72
    %v337 = vunpack.c.l.b16 %v73
    %v338 = vunpack.c.l.b16 %v74
    %v339 = vunpack.c.l.b16 %v75
    %v340 = vunpack.c.l.b16 %v76
    %v341 = vunpack.c.l.b16 %v77
    %v342 = vunpack.c.l.b16 %v78
    %v343 = vunpack.c.l.b16 %v79
    %v344 = vunpack.c.l.b16 %v80
    %v345 = vunpack.c.l.b16 %v81
    %v346 = vunpack.c.l.b16 %v82
    %v347 = vunpack.c.l.b16 %v83
    %v348 = vunpack.c.l.b16 %v84
    %v349 = vunpack.c.l.b16 %v85
    %v350 = vunpack.c.l.b16 %v86
    %v351 = vunpack.c.l.b16 %v87
    %v352 = vunpack.c.l.b16 %v88
    %v353 = vunpack.c.l.b16 %v89
    %v354 = vunpack.c.l.b16 %v90
    %v355 = vunpack.c.l.b16 %v91
    %v356 = vunpack.c.l.b16 %v92
    %v357 = vunpack.c.l.b16 %v93
    %v358 = vunpack.c.l.b16 %v94
    %v359 = vunpack.c.l.b16 %v95
    %v360 = vunpack.c.l.b16 %v96
    %v361 = vunpack.c.l.b16 %v97
    %v362 = vunpack.c.l.b16 %v98
    %v363 = vunpack.c.l.b16 %v99
    %v364 = vunpack.c.l.b16 %v100
    %v365 = vunpack.c.l.b16 %v101
    %v366 = vunpack.c.l.b16 %v102
    %v367 = vunpack.c.l.b16 %v103
    %v368 = vunpack.c.l.b16 %v104
    %v369 = vunpack.c.l.b16 %v105
    %v370 = vunpack.c.l.b16 %v106
    %v371 = vunpack.c.l.b16 %v107
    %v372 = vunpack.c.l.b16 %v108
    %v373 = vunpack.c.l.b16 %v109
    %v374 = vunpack.c.l.b16 %v110
    %v375 = vunpack.c.l.b16 %v111
    %v376 = vunpack.c.l.b16 %v112
    %v377 = vunpack.c.l.b16 %v113
    %v378 = vunpack.c.l.b16 %v114
    %v379 = vunpack.c.l.b16 %v115
    %v380 = vunpack.c.l.b16 %v116
    %v381 = vunpack.c.l.b16 %v117
    %v382 = vunpack.c.l.b16 %v118
    %v383 = vunpack.c.l.b16 %v119
    %v384 = vunpack.c.l.b16 %v120
    %v385 = vunpack.c.l.b16 %v121
    %v386 = vunpack.c.l.b16 %v122
    %v387 = vunpack.c.l.b16 %v123
    %v388 = vunpack.c.l.b16 %v124
    %v389 = vunpack.c.l.b16 %v125
    %v390 = vunpack.c.l.b16 %v126
    %v391 = vunpack.c.l.b16 %v127
    %v392 = vunpack.c.l.b16 %v128
    %v393 = vunpack.c.l.b16 %v129
    %v394 = vunpack.c.l.b16 %v130
    %v395 = vunpack.c.l.b16 %v131
    %v396 = vunpack.c.l.b16 %v132
    %v397 = vunpack.c.l.b16 %v133
    %v398 = vunpack.c.l.b16 %v134
    %v399 = vunpack.c.l.b16 %v135
    %v400 = vunpack.c.l.b16 %v136
    %v401 = vunpack.c.l.b16 %v137
    %v402 = vunpack.c.l.b16 %v138
    %v403 = vunpack.c.l.b16 %v139
    %v404 = vunpack.c.l.b16 %v140
    %v405 = vunpack.c.l.b16 %v141
    %v406 = vunpack.c.l.b16 %v142
    %v407 = vunpack.c.l.b16 %v143
    %v408 = vunpack.c.l.b16 %v144
    %v409 = vunpack.c.l.b16 %v145
    %v410 = vunpack.c.l.b16 %v146
    %v411 = vunpack.c.l.b16 %v147
    %v412 = vunpack.c.l.b16 %v148
    %v413 = vunpack.c.l.b16 %v149
    %v414 = vunpack.c.l.b16 %v150
    %v415 = vpack.c.b16 %v318, %v317
    %v416 = vpack.c.b16 %v320, %v319
    %v417 = vpack.c.b16 %v322, %v321
    %v418 = vpack.c.b16 %v324, %v323
    %v419 = vpack.c.b16 %v326, %v325
    %v420 = vpack.c.b16 %v328, %v327
    %v421 = vpack.c.b16 %v330, %v329
    %v422 = vpack.c.b16 %v332, %v331
    %v423 = vpack.c.b16 %v334, %v333
    %v424 = vpack.c.b16 %v336, %v335
    %v425 = vpack.c.b16 %v338, %v337
    %v426 = vpack.c.b16 %v340, %v339
    %v427 = vpack.c.b16 %v342, %v341
    %v428 = vpack.c.b16 %v344, %v343
    %v429 = vpack.c.b16 %v346, %v345
    %v430 = vpack.c.b16 %v348, %v347
    %v431 = vpack.c.b16 %v350, %v349
    %v432 = vpack.c.b16 %v352, %v351
    %v433 = vpack.c.b16 %v354, %v353
    %v434 = vpack.c.b16 %v356, %v355
    %v435 = vpack.c.b16 %v358, %v357
    %v436 = vpack.c.b16 %v360, %v359
    %v437 = vpack.c.b16 %v362, %v361
    %v438 = vpack.c.b16 %v364, %v363
    %v439 = vpack.c.b16 %v366, %v365
    %v440 = vpack.c.b16 %v368, %v367
    %v441 = vpack.c.b16 %v370, %v369
    %v442 = vpack.c.b16 %v372, %v371
    %v443 = vpack.c.b16 %v374, %v373
    %v444 = vpack.c.b16 %v376, %v375
    %v445 = vpack.c.b16 %v378, %v377
    %v446 = vpack.c.b16 %v380, %v379
    %v447 = vpack.c.b16 %v382, %v381
    %v448 = vpack.c.b16 %v384, %v383
    %v449 = vpack.c.b16 %v386, %v385
    %v450 = vpack.c.b16 %v388, %v387
    %v451 = vpack.c.b16 %v390, %v389
    %v452 = vpack.c.b16 %v392, %v391
    %v453 = vpack.c.b16 %v394, %v393
    %v454 = vpack.c.b16 %v396, %v395
    %v455 = vpack.c.b16 %v398, %v397
    %v456 = vpack.c.b16 %v400, %v399
    %v457 = vpack.c.b16 %v402, %v401
    %v458 = vpack.c.b16 %v404, %v403
    %v459 = vpack.c.b16 %v406, %v405
    %v460 = vpack.c.b16 %v408, %v407
    %v461 = vpack.c.b16 %v410, %v409
    %v462 = vpack.c.b16 %v412, %v411
    %v463 = vpack.c.b16 %v414, %v413
    %vm513 = vcmask 130048
    %v515 = vsel %vm513, %v212, 0
    %517 = vmatprep.subr.bf16.mxu0 0
    %518 = vmatpush1.bf16.msra.mxu0 %v415
    %519 = vmatprep.subr.bf16.mxu0 0
    %520 = vmatpush1.bf16.msra.mxu0 %v416
    %521 = vmatprep.subr.bf16.mxu0 0
    %522 = vmatpush1.bf16.msra.mxu0 %v417
    %523 = vmatprep.subr.bf16.mxu0 0
    %524 = vmatpush1.bf16.msra.mxu0 %v418
    %525 = vmatprep.subr.bf16.mxu0 0
    %526 = vmatpush1.bf16.msra.mxu0 %v419
    %527 = vmatprep.subr.bf16.mxu0 0
    %528 = vmatpush1.bf16.msra.mxu0 %v420
    %529 = vmatprep.subr.bf16.mxu0 0
    %530 = vmatpush1.bf16.msra.mxu0 %v421
    %531 = vmatprep.subr.bf16.mxu0 0
    %532 = vmatpush1.bf16.msra.mxu0 %v422
    %533 = vmatprep.subr.bf16.mxu0 0
    %534 = vmatpush1.bf16.msra.mxu0 %v423
    %535 = vmatprep.subr.bf16.mxu0 0
    %536 = vmatpush1.bf16.msra.mxu0 %v424
    %537 = vmatprep.subr.bf16.mxu0 0
    %538 = vmatpush1.bf16.msra.mxu0 %v425
    %539 = vmatprep.subr.bf16.mxu0 0
    %540 = vmatpush1.bf16.msra.mxu0 %v426
    %541 = vmatprep.subr.bf16.mxu0 0
    %542 = vmatpush1.bf16.msra.mxu0 %v427
    %543 = vmatprep.subr.bf16.mxu0 0
    %544 = vmatpush1.bf16.msra.mxu0 %v428
    %545 = vmatprep.subr.bf16.mxu0 0
    %546 = vmatpush1.bf16.msra.mxu0 %v429
    %547 = vmatprep.subr.bf16.mxu0 0
    %548 = vmatpush1.bf16.msra.mxu0 %v430
    %549 = vmatprep.mubr.bf16.mxu0 %v207
    %550 = vmatmul.mubr.bf16.gmra.mrb[0].mxu0 %v206
    %v551 = vpop.f32.mrb[0].mxu0
    %v552 = vadd.f32 %v182, %v551
    %v553 = vpop.f32.mrb[0].mxu0
    %v554 = vpop.f32.mrb[0].mxu0
    %v555 = vadd.f32 %v182, %v554
    %v556 = vpop.f32.mrb[0].mxu0
    %557 = vdwg.mxu0
    %558 = vmatprep.subr.bf16.mxu0 0
    %559 = vmatpush1.bf16.msra.mxu0 %v431
    %560 = vmatprep.subr.bf16.mxu0 0
    %561 = vmatpush1.bf16.msra.mxu0 %v432
    %562 = vmatprep.subr.bf16.mxu0 0
    %563 = vmatpush1.bf16.msra.mxu0 %v433
    %564 = vmatprep.subr.bf16.mxu0 0
    %565 = vmatpush1.bf16.msra.mxu0 %v434
    %566 = vmatprep.subr.bf16.mxu0 0
    %567 = vmatpush1.bf16.msra.mxu0 %v435
    %568 = vmatprep.subr.bf16.mxu0 0
    %569 = vmatpush1.bf16.msra.mxu0 %v436
    %570 = vmatprep.subr.bf16.mxu0 0
    %571 = vmatpush1.bf16.msra.mxu0 %v437
    %572 = vmatprep.subr.bf16.mxu0 0
    %573 = vmatpush1.bf16.msra.mxu0 %v438
    %574 = vmatprep.subr.bf16.mxu0 0
    %575 = vmatpush1.bf16.msra.mxu0 %v439
    %576 = vmatprep.subr.bf16.mxu0 0
    %577 = vmatpush1.bf16.msra.mxu0 %v440
    %578 = vmatprep.subr.bf16.mxu0 0
    %579 = vmatpush1.bf16.msra.mxu0 %v441
    %580 = vmatprep.subr.bf16.mxu0 0
    %581 = vmatpush1.bf16.msra.mxu0 %v442
    %582 = vmatprep.subr.bf16.mxu0 0
    %583 = vmatpush1.bf16.msra.mxu0 %v443
    %584 = vmatprep.subr.bf16.mxu0 0
    %585 = vmatpush1.bf16.msra.mxu0 %v444
    %586 = vmatprep.subr.bf16.mxu0 0
    %587 = vmatpush1.bf16.msra.mxu0 %v445
    %588 = vmatprep.subr.bf16.mxu0 0
    %589 = vmatpush1.bf16.msra.mxu0 %v446
    %590 = vmatprep.mubr.bf16.mxu0 %v209
    %591 = vmatmul.mubr.bf16.gmra.mrb[0].mxu0 %v208
    %v592 = vpop.f32.mrb[0].mxu0
    %v593 = vadd.f32 %v552, %v592
    %v594 = vpop.f32.mrb[0].mxu0
    %v595 = vpop.f32.mrb[0].mxu0
    %v596 = vadd.f32 %v555, %v595
    %v597 = vpop.f32.mrb[0].mxu0
    %598 = vdwg.mxu0
    %599 = vmatprep.subr.bf16.mxu0 0
    %600 = vmatpush1.bf16.msra.mxu0 %v447
    %601 = vmatprep.subr.bf16.mxu0 0
    %602 = vmatpush1.bf16.msra.mxu0 %v448
    %603 = vmatprep.subr.bf16.mxu0 0
    %604 = vmatpush1.bf16.msra.mxu0 %v449
    %605 = vmatprep.subr.bf16.mxu0 0
    %606 = vmatpush1.bf16.msra.mxu0 %v450
    %607 = vmatprep.subr.bf16.mxu0 0
    %608 = vmatpush1.bf16.msra.mxu0 %v451
    %609 = vmatprep.subr.bf16.mxu0 0
    %610 = vmatpush1.bf16.msra.mxu0 %v452
    %611 = vmatprep.subr.bf16.mxu0 0
    %612 = vmatpush1.bf16.msra.mxu0 %v453
    %613 = vmatprep.subr.bf16.mxu0 0
    %614 = vmatpush1.bf16.msra.mxu0 %v454
    %615 = vmatprep.subr.bf16.mxu0 0
    %616 = vmatpush1.bf16.msra.mxu0 %v455
    %617 = vmatprep.subr.bf16.mxu0 0
    %618 = vmatpush1.bf16.msra.mxu0 %v456
    %619 = vmatprep.subr.bf16.mxu0 0
    %620 = vmatpush1.bf16.msra.mxu0 %v457
    %621 = vmatprep.subr.bf16.mxu0 0
    %622 = vmatpush1.bf16.msra.mxu0 %v458
    %623 = vmatprep.subr.bf16.mxu0 0
    %624 = vmatpush1.bf16.msra.mxu0 %v459
    %625 = vmatprep.subr.bf16.mxu0 0
    %626 = vmatpush1.bf16.msra.mxu0 %v460
    %627 = vmatprep.subr.bf16.mxu0 0
    %628 = vmatpush1.bf16.msra.mxu0 %v461
    %629 = vmatprep.subr.bf16.mxu0 0
    %630 = vmatpush1.bf16.msra.mxu0 %v462
    %631 = vmatprep.mubr.bf16.mxu0 %v211
    %632 = vmatmul.mubr.bf16.gmra.mrb[0].mxu0 %v210
    %v633 = vpop.f32.mrb[0].mxu0
    %v634 = vadd.f32 %v593, %v633
    %v635 = vpop.f32.mrb[0].mxu0
    %v636 = vpop.f32.mrb[0].mxu0
    %v637 = vadd.f32 %v596, %v636
    %v638 = vpop.f32.mrb[0].mxu0
    %639 = vdwg.mxu0
    %640 = vmatprep.subr.bf16.mxu0 0
    %641 = vmatpush1.bf16.msra.mxu0 %v463
    %642 = vmatprep.subr.bf16.mxu0 0
    %643 = vmatpush1.bf16.msra.mxu0 0
    %644 = vmatprep.subr.bf16.mxu0 0
    %645 = vmatpush1.bf16.msra.mxu0 0
    %646 = vmatprep.subr.bf16.mxu0 0
    %647 = vmatpush1.bf16.msra.mxu0 0
    %648 = vmatprep.subr.bf16.mxu0 0
    %649 = vmatpush1.bf16.msra.mxu0 0
    %650 = vmatprep.subr.bf16.mxu0 0
    %651 = vmatpush1.bf16.msra.mxu0 0
    %652 = vmatprep.subr.bf16.mxu0 0
    %653 = vmatpush1.bf16.msra.mxu0 0
    %654 = vmatprep.subr.bf16.mxu0 0
    %655 = vmatpush1.bf16.msra.mxu0 0
    %656 = vmatprep.subr.bf16.mxu0 0
    %657 = vmatpush1.bf16.msra.mxu0 0
    %658 = vmatprep.subr.bf16.mxu0 0
    %659 = vmatpush1.bf16.msra.mxu0 0
    %660 = vmatprep.subr.bf16.mxu0 0
    %661 = vmatpush1.bf16.msra.mxu0 0
    %662 = vmatprep.subr.bf16.mxu0 0
    %663 = vmatpush1.bf16.msra.mxu0 0
    %664 = vmatprep.subr.bf16.mxu0 0
    %665 = vmatpush1.bf16.msra.mxu0 0
    %666 = vmatprep.subr.bf16.mxu0 0
    %667 = vmatpush1.bf16.msra.mxu0 0
    %668 = vmatprep.subr.bf16.mxu0 0
    %669 = vmatpush1.bf16.msra.mxu0 0
    %670 = vmatprep.subr.bf16.mxu0 0
    %671 = vmatpush1.bf16.msra.mxu0 0
    %672 = vmatprep.mubr.bf16.mxu0 0
    %673 = vmatmul.mubr.bf16.gmra.mrb[0].mxu0 %v515
    %v674 = vpop.f32.mrb[0].mxu0
    %v675 = vadd.f32 %v634, %v674
    %v676 = vpop.f32.mrb[0].mxu0
    %v677 = vpop.f32.mrb[0].mxu0
    %v678 = vadd.f32 %v637, %v677
    %v679 = vpop.f32.mrb[0].mxu0
    %680 = vdwg.mxu0
    %v681 = vmax.f32 %v675, 0.0
    %v682 = vmax.f32 %v678, 0.0
    %v683 = vpack.c.bf16 %v682, %v681
    %v685 = vlaneseq
    %v686 = vshrl.u32 %v685, 7
    %v687 = vsub.s32 0, %v686
    %v688 = vrot.slane %v168, %v687
    %v706 = vunpack.c.l.b16 %v152
    %v707 = vunpack.c.l.b16 %v153
    %v708 = vunpack.c.l.b16 %v154
    %v709 = vunpack.c.l.b16 %v155
    %v710 = vunpack.c.l.b16 %v156
    %v711 = vunpack.c.l.b16 %v157
    %v712 = vunpack.c.l.b16 %v158
    %v713 = vunpack.c.l.b16 %v159
    %v714 = vunpack.c.l.b16 %v160
    %v715 = vunpack.c.l.b16 %v161
    %v716 = vunpack.c.l.b16 %v162
    %v717 = vunpack.c.l.b16 %v163
    %v718 = vunpack.c.l.b16 %v164
    %v719 = vunpack.c.l.b16 %v165
    %v720 = vunpack.c.l.b16 %v166
    %v721 = vunpack.c.l.b16 %v167
    %v722 = vpack.c.b16 %v707, %v706
    %v723 = vpack.c.b16 %v709, %v708
    %v724 = vpack.c.b16 %v711, %v710
    %v725 = vpack.c.b16 %v713, %v712
    %v726 = vpack.c.b16 %v715, %v714
    %v727 = vpack.c.b16 %v717, %v716
    %v728 = vpack.c.b16 %v719, %v718
    %v729 = vpack.c.b16 %v721, %v720
    %738 = vmatprep.subr.bf16.mxu0 0
    %739 = vmatpush1.bf16.msra.mxu0 %v722
    %740 = vmatprep.subr.bf16.mxu0 0
    %741 = vmatpush1.bf16.msra.mxu0 %v723
    %742 = vmatprep.subr.bf16.mxu0 0
    %743 = vmatpush1.bf16.msra.mxu0 %v724
    %744 = vmatprep.subr.bf16.mxu0 0
    %745 = vmatpush1.bf16.msra.mxu0 %v725
    %746 = vmatprep.subr.bf16.mxu0 0
    %747 = vmatpush1.bf16.msra.mxu0 %v726
    %748 = vmatprep.subr.bf16.mxu0 0
    %749 = vmatpush1.bf16.msra.mxu0 %v727
    %750 = vmatprep.subr.bf16.mxu0 0
    %751 = vmatpush1.bf16.msra.mxu0 %v728
    %752 = vmatprep.subr.bf16.mxu0 0
    %753 = vmatpush1.bf16.msra.mxu0 %v729
    %754 = vmatprep.subr.bf16.mxu0 0
    %755 = vmatpush1.bf16.msra.mxu0 0
    %756 = vmatprep.subr.bf16.mxu0 0
    %757 = vmatpush1.bf16.msra.mxu0 0
    %758 = vmatprep.subr.bf16.mxu0 0
    %759 = vmatpush1.bf16.msra.mxu0 0
    %760 = vmatprep.subr.bf16.mxu0 0
    %761 = vmatpush1.bf16.msra.mxu0 0
    %762 = vmatprep.subr.bf16.mxu0 0
    %763 = vmatpush1.bf16.msra.mxu0 0
    %764 = vmatprep.subr.bf16.mxu0 0
    %765 = vmatpush1.bf16.msra.mxu0 0
    %766 = vmatprep.subr.bf16.mxu0 0
    %767 = vmatpush1.bf16.msra.mxu0 0
    %768 = vmatprep.subr.bf16.mxu0 0
    %769 = vmatpush1.bf16.msra.mxu0 0
    %770 = vmatprep.mubr.bf16.mxu0 0
    %771 = vmatmul.mubr.bf16.gmra.mrb[0].mxu0 %v683
    %v772 = vpop.f32.mrb[0].mxu0
    %v773 = vadd.f32 %v688, %v772
    %v774 = vpop.f32.mrb[0].mxu0
    %v775 = vpop.f32.mrb[0].mxu0
    %v776 = vadd.f32 %v688, %v775
    %v777 = vpop.f32.mrb[0].mxu0
    %778 = vdwg.mxu0
    %v779 = vmax.f32 %v773, 0.0
    %v780 = vmax.f32 %v776, 0.0
    %v781 = vpack.c.bf16 %v780, %v779
    %v783 = vlaneseq
    %v784 = vshrl.u32 %v783, 7
    %v785 = vsub.s32 0, %v784
    %v786 = vrot.slane %v177, %v785
    %v796 = vunpack.c.l.b16 %v169
    %v797 = vunpack.c.l.b16 %v170
    %v798 = vunpack.c.l.b16 %v171
    %v799 = vunpack.c.l.b16 %v172
    %v800 = vunpack.c.l.b16 %v173
    %v801 = vunpack.c.l.b16 %v174
    %v802 = vunpack.c.l.b16 %v175
    %v803 = vunpack.c.l.b16 %v176
    %v804 = vpack.c.b16 %v797, %v796
    %v805 = vpack.c.b16 %v799, %v798
    %v806 = vpack.c.b16 %v801, %v800
    %v807 = vpack.c.b16 %v803, %v802
    %vm812 = vcmask 523264
    %v814 = vsel %vm812, %v781, 0
    %816 = vmatprep.subr.bf16.mxu0 0
    %817 = vmatpush1.bf16.msra.mxu0 %v804
    %818 = vmatprep.subr.bf16.mxu0 0
    %819 = vmatpush1.bf16.msra.mxu0 %v805
    %820 = vmatprep.subr.bf16.mxu0 0
    %821 = vmatpush1.bf16.msra.mxu0 %v806
    %822 = vmatprep.subr.bf16.mxu0 0
    %823 = vmatpush1.bf16.msra.mxu0 %v807
    %824 = vmatprep.subr.bf16.mxu0 0
    %825 = vmatpush1.bf16.msra.mxu0 0
    %826 = vmatprep.subr.bf16.mxu0 0
    %827 = vmatpush1.bf16.msra.mxu0 0
    %828 = vmatprep.subr.bf16.mxu0 0
    %829 = vmatpush1.bf16.msra.mxu0 0
    %830 = vmatprep.subr.bf16.mxu0 0
    %831 = vmatpush1.bf16.msra.mxu0 0
    %832 = vmatprep.subr.bf16.mxu0 0
    %833 = vmatpush1.bf16.msra.mxu0 0
    %834 = vmatprep.subr.bf16.mxu0 0
    %835 = vmatpush1.bf16.msra.mxu0 0
    %836 = vmatprep.subr.bf16.mxu0 0
    %837 = vmatpush1.bf16.msra.mxu0 0
    %838 = vmatprep.subr.bf16.mxu0 0
    %839 = vmatpush1.bf16.msra.mxu0 0
    %840 = vmatprep.subr.bf16.mxu0 0
    %841 = vmatpush1.bf16.msra.mxu0 0
    %842 = vmatprep.subr.bf16.mxu0 0
    %843 = vmatpush1.bf16.msra.mxu0 0
    %844 = vmatprep.subr.bf16.mxu0 0
    %845 = vmatpush1.bf16.msra.mxu0 0
    %846 = vmatprep.subr.bf16.mxu0 0
    %847 = vmatpush1.bf16.msra.mxu0 0
    %848 = vmatprep.mubr.bf16.mxu0 0
    %849 = vmatmul.mubr.bf16.gmra.mrb[0].mxu0 %v814
    %v850 = vpop.f32.mrb[0].mxu0
    %v851 = vadd.f32 %v786, %v850
    %v852 = vpop.f32.mrb[0].mxu0
    %v853 = vpop.f32.mrb[0].mxu0
    %v854 = vadd.f32 %v786, %v853
    %v855 = vpop.f32.mrb[0].mxu0
    %856 = vdwg.mxu0
    %v858 = vunpack.c.l.b16 %v683
    %v859 = vunpack.c.h.b16 %v683
    %v860 = vpack.c.b16 %v858, %v858
    %v861 = vpack.c.b16 %v859, %v859
    %864 = vst [vmem:[#allocation5] sm:$0xf] %v860
    %865 = vst [vmem:[#allocation5 + $0x4] sm:$0xf] %v861
    %866 = vst [vmem:[#allocation6] sm:$0xff] %v851
    %867 = vst [vmem:[#allocation6 + $0x8] sm:$0xff] %v854
    // Predicated region
    $region34: #{tpu_custom_call.1} parent=1 // pred_check
      _
    $region35: #{tpu_custom_call.1} parent=1 // pred_check_branch
      %869 = sbr.rel (0) target = $region37
    $region36: #{tpu_custom_call.1} parent=1 // pred_region
      %s871 = ssub.s32 128, 128
      %872 = vsyncadd [#allocation4], %s871
      %s873 = sshll.u32 [#allocation5], 4
      %s874 = int_to_ptr.vmem [resolvable:$true] %s873
      %879 = dma.vmem_to_hbm [thread:$0]  %s874, 128, %s7, [#allocation4], 64, 64, 4
    $region37: #{tpu_custom_call.1} parent=1 // pred_fallthru
      _
    // Predicated region
    $region38: #{tpu_custom_call.1} parent=1 // pred_check
      _
    $region39: #{tpu_custom_call.1} parent=1 // pred_check_branch
      %881 = sbr.rel (0) target = $region41
    $region40: #{tpu_custom_call.1} parent=1 // pred_region
      %s883 = ssub.s32 256, 256
      %884 = vsyncadd [#allocation7], %s883
      %s885 = sshll.u32 [#allocation6], 4
      %s886 = int_to_ptr.vmem [resolvable:$true] %s885
      %891 = dma.vmem_to_hbm [thread:$0]  %s886, 256, %s8, [#allocation7], 128, 128, 8
    $region41: #{tpu_custom_call.1} parent=1 // pred_fallthru
      _
    // Predicated region
    $region42: #{tpu_custom_call.1} parent=1 // pred_check
      _
    $region43: #{tpu_custom_call.1} parent=1 // pred_check_branch
      %893 = sbr.rel (0) target = $region45
    $region44: #{tpu_custom_call.1} parent=1 // pred_region
      %894 = dma.done [#allocation4], 128
    $region45: #{tpu_custom_call.1} parent=1 // pred_fallthru
      _
    // Predicated region
    $region46: #{tpu_custom_call.1} parent=1 // pred_check
      _
    $region47: #{tpu_custom_call.1} parent=1 // pred_check_branch
      %896 = sbr.rel (0) target = $region49
    $region48: #{tpu_custom_call.1} parent=1 // pred_region
      %897 = dma.done [#allocation7], 256
    $region49: #{tpu_custom_call.1} parent=1 // pred_fallthru
      _
    %898 = vsyncpa [#allocation3], 1
    %899 = vsyncpa [#allocation4], 1
    %900 = vsyncpa [#allocation7], 1

</llo_original>
